<compile_context>
chip_gen: v7x
topology: tpu7x:2x2x1
jax: 0.10.0
libtpu: 0.0.40
codegen_flags: <defaults>
</compile_context>

<pallas_src>
import jax
import jax.numpy as jnp
from jax.experimental import pallas as pl
from jax.experimental.pallas import tpu as pltpu

STATE_DIM = 33
ACTION_DIM = 10
HIDDEN = 128
PAD = 128                    # lane-padded feature width used inside the kernel
DEFAULT_TILE_B_CAP = 2048    # batch-tile cap (review: 1024-2048; few-MiB VMEM)
MIN_SPLIT_B = 256            # above this, force >=2 grid steps (v7x megacore)


def _round_up(n, m):
    return ((n + m - 1) // m) * m


def _choose_tile_b(batch, tile_cap):
    """Batch tile: near-even split of `batch`, multiple of 8, capped at
    `tile_cap`, and >=2 grid steps when the batch is big enough to keep both
    v7x TensorCores busy. Padding waste is confined to the partial last block
    (at most tile-1 rows, typically < 8)."""
    n_steps = max(1, -(-batch // tile_cap))
    if n_steps < 2 and batch >= MIN_SPLIT_B:
        n_steps = 2
    return _round_up(-(-batch // n_steps), 8)


def _qnet_kernel(x_ref, w1_ref, b1_ref, w2_ref, b2_ref, w3_ref, b3_ref,
                 o_ref, xpad_ref):
    # In-kernel 33 -> 128 lane pad + bf16 cast. The zero fill, masked
    # sub-slice store and reload are VMEM-local (vst/vld slots) and hide under
    # the MXU-bound body; re-zeroing every step keeps the scratch correct
    # regardless of how the parallel grid is sharded across cores.
    xpad_ref[...] = jnp.zeros_like(xpad_ref)
    xpad_ref[:, :STATE_DIM] = x_ref[...].astype(xpad_ref.dtype)
    x = xpad_ref[...]                                                # (TB, 128)

    # Fused 3-layer MLP; bf16 MXU matmuls with fp32 accumulation, bias adds
    # and ReLU on the VPU slot.
    h1 = jnp.dot(x, w1_ref[...], preferred_element_type=jnp.float32) + b1_ref[...]
    h1 = jnp.maximum(h1, 0.0).astype(w2_ref.dtype)                   # (TB, 128)
    h2 = jnp.dot(h1, w2_ref[...], preferred_element_type=jnp.float32) + b2_ref[...]
    h2 = jnp.maximum(h2, 0.0).astype(w3_ref.dtype)                   # (TB, 128)
    out = jnp.dot(h2, w3_ref[...], preferred_element_type=jnp.float32) + b3_ref[...]

    # Lane-masked store of only the 10 real action columns (out_shape is
    # (B, ACTION_DIM), so no post-kernel slice pass is needed).
    o_ref[...] = out[:, :ACTION_DIM].astype(o_ref.dtype)


def _pad_params(params, compute_dtype):
    """Zero-pad to lane-dense shapes and cast matmul inputs to compute_dtype.
    Weights are stored [in, out] (transposed vs PyTorch) so the kernel does
    y = x @ W + b. Zero-padded rows/cols contribute exactly zero."""
    w1 = jnp.zeros((PAD, HIDDEN), compute_dtype).at[:STATE_DIM, :].set(
        params["w1"].astype(compute_dtype))
    w2 = params["w2"].astype(compute_dtype)
    w3 = jnp.zeros((HIDDEN, PAD), compute_dtype).at[:, :ACTION_DIM].set(
        params["w3"].astype(compute_dtype))
    b1 = params["b1"].astype(jnp.float32)                            # (1, 128)
    b2 = params["b2"].astype(jnp.float32)                            # (1, 128)
    b3 = jnp.zeros((1, PAD), jnp.float32).at[:, :ACTION_DIM].set(
        params["b3"].astype(jnp.float32))
    return w1, b1, w2, b2, w3, b3


def qnetwork_forward(x, params, compute_dtype=jnp.bfloat16,
                     tile_cap=DEFAULT_TILE_B_CAP):
    """x: (B, STATE_DIM) float32. params: dict of w1,b1,w2,b2,w3,b3.
    Returns (B, ACTION_DIM) float32 Q-values."""
    B = x.shape[0]
    tb = _choose_tile_b(B, tile_cap)
    grid_b = pl.cdiv(B, tb)

    w1, b1, w2, b2, w3, b3 = _pad_params(params, compute_dtype)

    resident = lambda shape: pl.BlockSpec(shape, lambda i: (0, 0))

    # True (unpadded layer-1) FLOPs and true HBM traffic (f32 x, bf16 padded
    # weights, 10-wide f32 output).
    flops = 2 * B * (STATE_DIM * HIDDEN + HIDDEN * HIDDEN + HIDDEN * ACTION_DIM)
    bytes_accessed = (
        x.size * x.dtype.itemsize
        + sum(a.size * a.dtype.itemsize for a in (w1, b1, w2, b2, w3, b3))
        + B * ACTION_DIM * 4)

    return pl.pallas_call(
        _qnet_kernel,
        out_shape=jax.ShapeDtypeStruct((B, ACTION_DIM), jnp.float32),
        grid=(grid_b,),
        in_specs=[
            pl.BlockSpec((tb, STATE_DIM), lambda i: (i, 0)),  # x: batch-tiled
            resident((PAD, HIDDEN)), resident((1, HIDDEN)),    # weights/biases:
            resident((HIDDEN, HIDDEN)), resident((1, HIDDEN)), #   VMEM-resident
            resident((HIDDEN, PAD)), resident((1, PAD)),
        ],
        out_specs=pl.BlockSpec((tb, ACTION_DIM), lambda i: (i, 0)),
        scratch_shapes=[pltpu.VMEM((tb, PAD), compute_dtype)],  # in-kernel x pad
        compiler_params=pltpu.CompilerParams(
            dimension_semantics=("parallel",),
            vmem_limit_bytes=32 << 20,
        ),
        cost_estimate=pl.CostEstimate(
            flops=flops, transcendentals=0, bytes_accessed=bytes_accessed),
    )(x, w1, b1, w2, b2, w3, b3)


def init_params(key):
    """Deterministic init mimicking nn.Linear's U(-1/sqrt(fan_in), 1/sqrt(fan_in)).
    Weights stored as [in, out] (transposed vs PyTorch) for x @ W."""
    keys = jax.random.split(key, 6)

    def linear(kw, kb, fan_in, fan_out):
        bound = 1.0 / jnp.sqrt(jnp.float32(fan_in))
        w = jax.random.uniform(kw, (fan_in, fan_out), jnp.float32, -bound, bound)
        b = jax.random.uniform(kb, (1, fan_out), jnp.float32, -bound, bound)
        return w, b

    w1, b1 = linear(keys[0], keys[1], STATE_DIM, HIDDEN)
    w2, b2 = linear(keys[2], keys[3], HIDDEN, HIDDEN)
    w3, b3 = linear(keys[4], keys[5], HIDDEN, ACTION_DIM)
    return {"w1": w1, "b1": b1, "w2": w2, "b2": b2, "w3": w3, "b3": b3}


def _reference(x, p, compute_dtype):
    """Plain-jnp reference using the same matmul precision as the kernel."""
    cd = compute_dtype
    h1 = jnp.maximum(
        jnp.dot(x.astype(cd), p["w1"].astype(cd),
                preferred_element_type=jnp.float32) + p["b1"], 0.0)
    h2 = jnp.maximum(
        jnp.dot(h1.astype(cd), p["w2"].astype(cd),
                preferred_element_type=jnp.float32) + p["b2"], 0.0)
    return jnp.dot(h2.astype(cd), p["w3"].astype(cd),
                   preferred_element_type=jnp.float32) + p["b3"]


if __name__ == "__main__":
    key = jax.random.PRNGKey(0)
    k_params, k_x = jax.random.split(key)
    params = init_params(k_params)

    # batch=8: single grid step. batch=300: two parallel steps + a partial
    # (non-multiple-of-8) last block, exercising the clamped read/write path.
    for batch in (8, 300):
        kx = jax.random.fold_in(k_x, batch)
        x = jax.random.normal(kx, (batch, STATE_DIM), dtype=jnp.float32)

        out = jax.block_until_ready(qnetwork_forward(x, params))
        assert out.shape == (batch, ACTION_DIM), out.shape

        # Matched-precision (bf16-input / fp32-accumulate) reference.
        ref_bf16 = _reference(x, params, jnp.bfloat16)
        assert jnp.allclose(out, ref_bf16, atol=1e-2, rtol=1e-2), \
            f"batch={batch}: mismatch vs matched-precision reference"

        # Loose sanity check vs a full-fp32 reference.
        ref_f32 = _reference(x, params, jnp.float32)
        assert jnp.allclose(out, ref_f32, atol=1e-1, rtol=1e-1), \
            f"batch={batch}: mismatch vs fp32 reference"

    print("KERNEL_OK")
</pallas_src>

<mosaic_0001>
module attributes {stable_mosaic.version = 11 : i64} {
  func.func @_qnet_kernel(%arg0: i32, %arg1: memref<8x33xf32, #tpu.memory_space<vmem>>, %arg2: memref<128x128xbf16, #tpu.memory_space<vmem>>, %arg3: memref<1x128xf32, #tpu.memory_space<vmem>>, %arg4: memref<128x128xbf16, #tpu.memory_space<vmem>>, %arg5: memref<1x128xf32, #tpu.memory_space<vmem>>, %arg6: memref<128x128xbf16, #tpu.memory_space<vmem>>, %arg7: memref<1x128xf32, #tpu.memory_space<vmem>>, %arg8: memref<8x10xf32, #tpu.memory_space<vmem>>, %arg9: memref<8x128xbf16, #tpu.memory_space<vmem>>) attributes {dimension_semantics = [#tpu.dimension_semantics<parallel>], iteration_bounds = array<i64: 1>, scalar_prefetch = 0 : i64, scratch_operands = 1 : i64, tpu.core_type = #tpu.core_type<tc>, window_params = [{transform_indices = @transform_0, window_bounds = array<i64: 8, 33>}, {pipeline_mode = #tpu.pipeline_mode<synchronous>, transform_indices = @transform_1, window_bounds = array<i64: 128, 128>}, {pipeline_mode = #tpu.pipeline_mode<synchronous>, transform_indices = @transform_2, window_bounds = array<i64: 1, 128>}, {pipeline_mode = #tpu.pipeline_mode<synchronous>, transform_indices = @transform_3, window_bounds = array<i64: 128, 128>}, {pipeline_mode = #tpu.pipeline_mode<synchronous>, transform_indices = @transform_4, window_bounds = array<i64: 1, 128>}, {pipeline_mode = #tpu.pipeline_mode<synchronous>, transform_indices = @transform_5, window_bounds = array<i64: 128, 128>}, {pipeline_mode = #tpu.pipeline_mode<synchronous>, transform_indices = @transform_6, window_bounds = array<i64: 1, 128>}, {transform_indices = @transform_7, window_bounds = array<i64: 8, 10>}]} {
    %cst = arith.constant 0.000000e+00 : bf16
    %0 = vector.broadcast %cst : bf16 to vector<8x128xbf16>
    %c0 = arith.constant 0 : index
    %c0_0 = arith.constant 0 : index
    %1 = vector.load %arg9[%c0, %c0_0] : memref<8x128xbf16, #tpu.memory_space<vmem>>, vector<8x128xbf16>
    tpu.vector_store %arg9[%c0, %c0_0], %0 {strides = array<i32>} : memref<8x128xbf16, #tpu.memory_space<vmem>>, vector<8x128xbf16>,
    %c0_1 = arith.constant 0 : index
    %c0_2 = arith.constant 0 : index
    %2 = vector.load %arg1[%c0_1, %c0_2] : memref<8x33xf32, #tpu.memory_space<vmem>>, vector<8x33xf32>
    %3 = arith.truncf %2 : vector<8x33xf32> to vector<8x33xbf16>
    %c0_3 = arith.constant 0 : index
    %c0_4 = arith.constant 0 : index
    %4 = vector.load %arg9[%c0_3, %c0_4] : memref<8x128xbf16, #tpu.memory_space<vmem>>, vector<8x33xbf16>
    tpu.vector_store %arg9[%c0_3, %c0_4], %3 {strides = array<i32>} : memref<8x128xbf16, #tpu.memory_space<vmem>>, vector<8x33xbf16>,
    %c0_5 = arith.constant 0 : index
    %c0_6 = arith.constant 0 : index
    %5 = vector.load %arg9[%c0_5, %c0_6] : memref<8x128xbf16, #tpu.memory_space<vmem>>, vector<8x128xbf16>
    %c0_7 = arith.constant 0 : index
    %c0_8 = arith.constant 0 : index
    %6 = vector.load %arg2[%c0_7, %c0_8] : memref<128x128xbf16, #tpu.memory_space<vmem>>, vector<128x128xbf16>
    %cst_9 = arith.constant dense<0.000000e+00> : vector<8x128xf32>
    %7 = tpu.matmul %5, %6, %cst_9 {dimension_numbers = #tpu.dot_dimension_numbers<[1], [0], [0], [1], [0, 0, 1, 1], [], []>} : vector<8x128xbf16>, vector<128x128xbf16>, vector<8x128xf32> -> vector<8x128xf32>
    %c0_10 = arith.constant 0 : index
    %c0_11 = arith.constant 0 : index
    %8 = vector.load %arg3[%c0_10, %c0_11] : memref<1x128xf32, #tpu.memory_space<vmem>>, vector<1x128xf32>
    %9 = vector.broadcast %8 : vector<1x128xf32> to vector<8x128xf32>
    %10 = arith.addf %7, %9 : vector<8x128xf32>
    %cst_12 = arith.constant 0.000000e+00 : f32
    %11 = vector.broadcast %cst_12 : f32 to vector<8x128xf32>
    %12 = arith.maximumf %10, %11 : vector<8x128xf32>
    %13 = arith.truncf %12 : vector<8x128xf32> to vector<8x128xbf16>
    %c0_13 = arith.constant 0 : index
    %c0_14 = arith.constant 0 : index
    %14 = vector.load %arg4[%c0_13, %c0_14] : memref<128x128xbf16, #tpu.memory_space<vmem>>, vector<128x128xbf16>
    %cst_15 = arith.constant dense<0.000000e+00> : vector<8x128xf32>
    %15 = tpu.matmul %13, %14, %cst_15 {dimension_numbers = #tpu.dot_dimension_numbers<[1], [0], [0], [1], [0, 0, 1, 1], [], []>} : vector<8x128xbf16>, vector<128x128xbf16>, vector<8x128xf32> -> vector<8x128xf32>
    %c0_16 = arith.constant 0 : index
    %c0_17 = arith.constant 0 : index
    %16 = vector.load %arg5[%c0_16, %c0_17] : memref<1x128xf32, #tpu.memory_space<vmem>>, vector<1x128xf32>
    %17 = vector.broadcast %16 : vector<1x128xf32> to vector<8x128xf32>
    %18 = arith.addf %15, %17 : vector<8x128xf32>
    %cst_18 = arith.constant 0.000000e+00 : f32
    %19 = vector.broadcast %cst_18 : f32 to vector<8x128xf32>
    %20 = arith.maximumf %18, %19 : vector<8x128xf32>
    %21 = arith.truncf %20 : vector<8x128xf32> to vector<8x128xbf16>
    %c0_19 = arith.constant 0 : index
    %c0_20 = arith.constant 0 : index
    %22 = vector.load %arg6[%c0_19, %c0_20] : memref<128x128xbf16, #tpu.memory_space<vmem>>, vector<128x128xbf16>
    %cst_21 = arith.constant dense<0.000000e+00> : vector<8x128xf32>
    %23 = tpu.matmul %21, %22, %cst_21 {dimension_numbers = #tpu.dot_dimension_numbers<[1], [0], [0], [1], [0, 0, 1, 1], [], []>} : vector<8x128xbf16>, vector<128x128xbf16>, vector<8x128xf32> -> vector<8x128xf32>
    %c0_22 = arith.constant 0 : index
    %c0_23 = arith.constant 0 : index
    %24 = vector.load %arg7[%c0_22, %c0_23] : memref<1x128xf32, #tpu.memory_space<vmem>>, vector<1x128xf32>
    %25 = vector.broadcast %24 : vector<1x128xf32> to vector<8x128xf32>
    %26 = arith.addf %23, %25 : vector<8x128xf32>
    %27 = vector.extract_strided_slice %26 {offsets = [0, 0], sizes = [8, 10], strides = [1, 1]} : vector<8x128xf32> to vector<8x10xf32>
    %c0_24 = arith.constant 0 : index
    %c0_25 = arith.constant 0 : index
    %28 = vector.load %arg8[%c0_24, %c0_25] : memref<8x10xf32, #tpu.memory_space<vmem>>, vector<8x10xf32>
    tpu.vector_store %arg8[%c0_24, %c0_25], %27 {strides = array<i32>} : memref<8x10xf32, #tpu.memory_space<vmem>>, vector<8x10xf32>,
    return
  }
  func.func @transform_0(%arg0: i32) -> (i32, i32) {
    %c0_i32 = arith.constant 0 : i32
    %c0_i32_0 = arith.constant 0 : i32
    return %arg0, %c0_i32 : i32, i32
  }
  func.func @transform_1(%arg0: i32) -> (i32, i32) {
    %c0_i32 = arith.constant 0 : i32
    %c0_i32_0 = arith.constant 0 : i32
    %c0_i32_1 = arith.constant 0 : i32
    return %c0_i32, %c0_i32_0 : i32, i32
  }
  func.func @transform_2(%arg0: i32) -> (i32, i32) {
    %c0_i32 = arith.constant 0 : i32
    %c0_i32_0 = arith.constant 0 : i32
    %c0_i32_1 = arith.constant 0 : i32
    return %c0_i32, %c0_i32_0 : i32, i32
  }
  func.func @transform_3(%arg0: i32) -> (i32, i32) {
    %c0_i32 = arith.constant 0 : i32
    %c0_i32_0 = arith.constant 0 : i32
    %c0_i32_1 = arith.constant 0 : i32
    return %c0_i32, %c0_i32_0 : i32, i32
  }
  func.func @transform_4(%arg0: i32) -> (i32, i32) {
    %c0_i32 = arith.constant 0 : i32
    %c0_i32_0 = arith.constant 0 : i32
    %c0_i32_1 = arith.constant 0 : i32
    return %c0_i32, %c0_i32_0 : i32, i32
  }
  func.func @transform_5(%arg0: i32) -> (i32, i32) {
    %c0_i32 = arith.constant 0 : i32
    %c0_i32_0 = arith.constant 0 : i32
    %c0_i32_1 = arith.constant 0 : i32
    return %c0_i32, %c0_i32_0 : i32, i32
  }
  func.func @transform_6(%arg0: i32) -> (i32, i32) {
    %c0_i32 = arith.constant 0 : i32
    %c0_i32_0 = arith.constant 0 : i32
    %c0_i32_1 = arith.constant 0 : i32
    return %c0_i32, %c0_i32_0 : i32, i32
  }
  func.func @transform_7(%arg0: i32) -> (i32, i32) {
    %c0_i32 = arith.constant 0 : i32
    %c0_i32_0 = arith.constant 0 : i32
    return %arg0, %c0_i32 : i32, i32
  }
}

</mosaic_0001>

<llo_original>
// kernel: tpu_custom_call.1
$region0: #{tpu_custom_call.1}
  #allocation0 [shape = 'u32[]', space=smem, size = 0x4, offset = 0x4, fixed_abs, tag = 'smem constant byte address 0x4 - core index']
  #allocation1 [shape = 'u32[144,128]{1,0:T(1,128)}', space=vmem, size = 0x12000, scoped, tag = 'internal scratch']
  #allocation2 [shape = 'bf16[8,128]{1,0:T(8,128)(2,1)}', space=vmem, size = 0x800, scoped, tag = 'scratch operand']
  %s0 = inlined_call_operand.hbm [shape: f32[8,33], index: 0, kind: input, shape index: {}]
  %s1 = inlined_call_operand.hbm [shape: bf16[128,128], index: 1, kind: input, shape index: {}]
  %s2 = inlined_call_operand.vmem [shape: f32[1,128], index: 2, kind: input, shape index: {}]
  %s3 = inlined_call_operand.hbm [shape: bf16[128,128], index: 3, kind: input, shape index: {}]
  %s4 = inlined_call_operand.vmem [shape: f32[1,128], index: 4, kind: input, shape index: {}]
  %s5 = inlined_call_operand.hbm [shape: bf16[128,128], index: 5, kind: input, shape index: {}]
  %s6 = inlined_call_operand.vmem [shape: f32[1,128], index: 6, kind: input, shape index: {}]
  %s7 = inlined_call_operand.hbm [shape: f32[8,10], index: 7, kind: output, shape index: {}]
  %s8 = sld [smem:[#allocation0]]
  $region54: #{tpu_custom_call.1} parent=0
    _
  %s10 = ssub.s32 1, %s8
  %s11 = scalar_select 0, %s10, %s8
  $region1: #{tpu_custom_call.1} parent=0
    #allocation3 [shape = 'u8[4096]{0}', space=vmem, size = 0x1000, scoped, tag = 'input window, operand 0, single buffered']
    #allocation4 [shape = 's32[1]{0}', space=sflag, size = 0x4, scoped, tag = 'scoped memory for tpu_custom_call.1']
    #allocation5 [shape = 's32[1]{0}', space=sflag, size = 0x4, scoped, tag = 'scoped memory for tpu_custom_call.1']
    #allocation6 [shape = 'u8[32768]{0}', space=vmem, size = 0x8000, scoped, tag = 'input window, operand 1, single buffered']
    #allocation7 [shape = 's32[1]{0}', space=sflag, size = 0x4, scoped, tag = 'scoped memory for tpu_custom_call.1']
    #allocation8 [shape = 'u8[32768]{0}', space=vmem, size = 0x8000, scoped, tag = 'input window, operand 3, single buffered']
    #allocation9 [shape = 'u8[32768]{0}', space=vmem, size = 0x8000, scoped, tag = 'input window, operand 5, single buffered']
    #allocation10 [shape = 's32[1]{0}', space=sflag, size = 0x4, scoped, tag = 'scoped memory for tpu_custom_call.1']
    #allocation11 [shape = 'u8[4096]{0}', space=vmem, size = 0x1000, scoped, tag = 'output window, operand 0, single buffered']
    %12 = vsyncpa [#allocation4], 0
    %13 = vsyncpa [#allocation7], 0
    %14 = vsyncpa [#allocation10], 0
    %15 = vsyncpa [#allocation5], 0
    // Predicated region
    $region2: #{tpu_custom_call.1} parent=1 // pred_check
      _
    $region3: #{tpu_custom_call.1} parent=1 // pred_check_branch
      %17 = sbr.rel (0) target = $region5
    $region4: #{tpu_custom_call.1} parent=1 // pred_region
      %s19 = ssub.s32 128, 128
      %20 = vsyncadd [#allocation4], %s19
      %s22 = sshll.u32 [#allocation3], 4
      %s23 = int_to_ptr.vmem [resolvable:$true] %s22
      %25 = dma.hbm_to_vmem [thread:$0]  %s0, 128, %s23, [#allocation4]
    $region5: #{tpu_custom_call.1} parent=1 // pred_fallthru
      _
    // Predicated region
    $region6: #{tpu_custom_call.1} parent=1 // pred_check
      _
    $region7: #{tpu_custom_call.1} parent=1 // pred_check_branch
      %27 = sbr.rel (0) target = $region9
    $region8: #{tpu_custom_call.1} parent=1 // pred_region
      %s29 = ssub.s32 1024, 1024
      %30 = vsyncadd [#allocation7], %s29
      %s31 = sshll.u32 [#allocation6], 4
      %s32 = int_to_ptr.vmem [resolvable:$true] %s31
      %37 = dma.hbm_to_vmem [thread:$0]  %s1, 1024, %s32, [#allocation7], 64, 64, 4
    $region9: #{tpu_custom_call.1} parent=1 // pred_fallthru
      _
    // Predicated region
    $region10: #{tpu_custom_call.1} parent=1 // pred_check
      _
    $region11: #{tpu_custom_call.1} parent=1 // pred_check_branch
      %39 = sbr.rel (0) target = $region13
    $region12: #{tpu_custom_call.1} parent=1 // pred_region
      _
    $region13: #{tpu_custom_call.1} parent=1 // pred_fallthru
      _
    // Predicated region
    $region14: #{tpu_custom_call.1} parent=1 // pred_check
      _
    $region15: #{tpu_custom_call.1} parent=1 // pred_check_branch
      %41 = sbr.rel (0) target = $region17
    $region16: #{tpu_custom_call.1} parent=1 // pred_region
      %s43 = ssub.s32 1024, 1024
      %44 = vsyncadd [#allocation7], %s43
      %s45 = sshll.u32 [#allocation8], 4
      %s46 = int_to_ptr.vmem [resolvable:$true] %s45
      %51 = dma.hbm_to_vmem [thread:$0]  %s3, 1024, %s46, [#allocation7], 64, 64, 4
    $region17: #{tpu_custom_call.1} parent=1 // pred_fallthru
      _
    // Predicated region
    $region18: #{tpu_custom_call.1} parent=1 // pred_check
      _
    $region19: #{tpu_custom_call.1} parent=1 // pred_check_branch
      %53 = sbr.rel (0) target = $region21
    $region20: #{tpu_custom_call.1} parent=1 // pred_region
      _
    $region21: #{tpu_custom_call.1} parent=1 // pred_fallthru
      _
    // Predicated region
    $region22: #{tpu_custom_call.1} parent=1 // pred_check
      _
    $region23: #{tpu_custom_call.1} parent=1 // pred_check_branch
      %55 = sbr.rel (0) target = $region25
    $region24: #{tpu_custom_call.1} parent=1 // pred_region
      %s57 = ssub.s32 1024, 1024
      %58 = vsyncadd [#allocation10], %s57
      %s59 = sshll.u32 [#allocation9], 4
      %s60 = int_to_ptr.vmem [resolvable:$true] %s59
      %65 = dma.hbm_to_vmem [thread:$0]  %s5, 1024, %s60, [#allocation10], 64, 64, 4
    $region25: #{tpu_custom_call.1} parent=1 // pred_fallthru
      _
    // Predicated region
    $region26: #{tpu_custom_call.1} parent=1 // pred_check
      _
    $region27: #{tpu_custom_call.1} parent=1 // pred_check_branch
      %67 = sbr.rel (0) target = $region29
    $region28: #{tpu_custom_call.1} parent=1 // pred_region
      _
    $region29: #{tpu_custom_call.1} parent=1 // pred_fallthru
      _
    // Predicated region
    $region30: #{tpu_custom_call.1} parent=1 // pred_check
      _
    $region31: #{tpu_custom_call.1} parent=1 // pred_check_branch
      %69 = sbr.rel (0) target = $region33
    $region32: #{tpu_custom_call.1} parent=1 // pred_region
      %70 = dma.done [#allocation4], 128
    $region33: #{tpu_custom_call.1} parent=1 // pred_fallthru
      _
    // Predicated region
    $region34: #{tpu_custom_call.1} parent=1 // pred_check
      _
    $region35: #{tpu_custom_call.1} parent=1 // pred_check_branch
      %72 = sbr.rel (0) target = $region37
    $region36: #{tpu_custom_call.1} parent=1 // pred_region
      %73 = dma.done [#allocation7], 1024
    $region37: #{tpu_custom_call.1} parent=1 // pred_fallthru
      _
    // Predicated region
    $region38: #{tpu_custom_call.1} parent=1 // pred_check
      _
    $region39: #{tpu_custom_call.1} parent=1 // pred_check_branch
      %75 = sbr.rel (0) target = $region41
    $region40: #{tpu_custom_call.1} parent=1 // pred_region
      %76 = dma.done [#allocation7], 1024
    $region41: #{tpu_custom_call.1} parent=1 // pred_fallthru
      _
    // Predicated region
    $region42: #{tpu_custom_call.1} parent=1 // pred_check
      _
    $region43: #{tpu_custom_call.1} parent=1 // pred_check_branch
      %78 = sbr.rel (0) target = $region45
    $region44: #{tpu_custom_call.1} parent=1 // pred_region
      %79 = dma.done [#allocation10], 1024
    $region45: #{tpu_custom_call.1} parent=1 // pred_fallthru
      _
    %81 = vst [vmem:[#allocation2] sm:$0xf] 0
    %v82 = vld [vmem:[#allocation3] sm:$0xff]
    %v83 = vpack.c.bf16 %v82, %v82
    %vm84 = vcmask 265216
    %85 = vst.msk [vmem:[#allocation2] sm:$0xf] %vm84, %v83
    %v86 = vld [vmem:[#allocation2] sm:$0xf]
    %v87 = vld [vmem:[#allocation6] sm:$0xf]
    %v88 = vld [vmem:[#allocation6 + $0x4] sm:$0xf]
    %v89 = vld [vmem:[#allocation6 + $0x8] sm:$0xf]
    %v90 = vld [vmem:[#allocation6 + $0xc] sm:$0xf]
    %v91 = vld [vmem:[#allocation6 + $0x10] sm:$0xf]
    %v92 = vld [vmem:[#allocation6 + $0x14] sm:$0xf]
    %v93 = vld [vmem:[#allocation6 + $0x18] sm:$0xf]
    %v94 = vld [vmem:[#allocation6 + $0x1c] sm:$0xf]
    %v95 = vld [vmem:[#allocation6 + $0x20] sm:$0xf]
    %v96 = vld [vmem:[#allocation6 + $0x24] sm:$0xf]
    %v97 = vld [vmem:[#allocation6 + $0x28] sm:$0xf]
    %v98 = vld [vmem:[#allocation6 + $0x2c] sm:$0xf]
    %v99 = vld [vmem:[#allocation6 + $0x30] sm:$0xf]
    %v100 = vld [vmem:[#allocation6 + $0x34] sm:$0xf]
    %v101 = vld [vmem:[#allocation6 + $0x38] sm:$0xf]
    %v102 = vld [vmem:[#allocation6 + $0x3c] sm:$0xf]
    %v103 = vld [vmem:[%s2] sm:$0x1]
    %v105 = vlaneseq
    %v106 = vshrl.u32 %v105, 7
    %v107 = vsub.s32 0, %v106
    %v108 = vrot.slane %v103, %v107
    %v126 = vunpack.c.l.b16 %v87
    %v127 = vunpack.c.l.b16 %v88
    %v128 = vunpack.c.l.b16 %v89
    %v129 = vunpack.c.l.b16 %v90
    %v130 = vunpack.c.l.b16 %v91
    %v131 = vunpack.c.l.b16 %v92
    %v132 = vunpack.c.l.b16 %v93
    %v133 = vunpack.c.l.b16 %v94
    %v134 = vunpack.c.l.b16 %v95
    %v135 = vunpack.c.l.b16 %v96
    %v136 = vunpack.c.l.b16 %v97
    %v137 = vunpack.c.l.b16 %v98
    %v138 = vunpack.c.l.b16 %v99
    %v139 = vunpack.c.l.b16 %v100
    %v140 = vunpack.c.l.b16 %v101
    %v141 = vunpack.c.l.b16 %v102
    %v142 = vpack.c.b16 %v127, %v126
    %v143 = vpack.c.b16 %v129, %v128
    %v144 = vpack.c.b16 %v131, %v130
    %v145 = vpack.c.b16 %v133, %v132
    %v146 = vpack.c.b16 %v135, %v134
    %v147 = vpack.c.b16 %v137, %v136
    %v148 = vpack.c.b16 %v139, %v138
    %v149 = vpack.c.b16 %v141, %v140
    %158 = vmatprep.subr.bf16.mxu0 0
    %159 = vmatpush1.bf16.msra.mxu0 %v142
    %160 = vmatprep.subr.bf16.mxu0 0
    %161 = vmatpush1.bf16.msra.mxu0 %v143
    %162 = vmatprep.subr.bf16.mxu0 0
    %163 = vmatpush1.bf16.msra.mxu0 %v144
    %164 = vmatprep.subr.bf16.mxu0 0
    %165 = vmatpush1.bf16.msra.mxu0 %v145
    %166 = vmatprep.subr.bf16.mxu0 0
    %167 = vmatpush1.bf16.msra.mxu0 %v146
    %168 = vmatprep.subr.bf16.mxu0 0
    %169 = vmatpush1.bf16.msra.mxu0 %v147
    %170 = vmatprep.subr.bf16.mxu0 0
    %171 = vmatpush1.bf16.msra.mxu0 %v148
    %172 = vmatprep.subr.bf16.mxu0 0
    %173 = vmatpush1.bf16.msra.mxu0 %v149
    %174 = vmatprep.subr.bf16.mxu0 0
    %175 = vmatpush1.bf16.msra.mxu0 0
    %176 = vmatprep.subr.bf16.mxu0 0
    %177 = vmatpush1.bf16.msra.mxu0 0
    %178 = vmatprep.subr.bf16.mxu0 0
    %179 = vmatpush1.bf16.msra.mxu0 0
    %180 = vmatprep.subr.bf16.mxu0 0
    %181 = vmatpush1.bf16.msra.mxu0 0
    %182 = vmatprep.subr.bf16.mxu0 0
    %183 = vmatpush1.bf16.msra.mxu0 0
    %184 = vmatprep.subr.bf16.mxu0 0
    %185 = vmatpush1.bf16.msra.mxu0 0
    %186 = vmatprep.subr.bf16.mxu0 0
    %187 = vmatpush1.bf16.msra.mxu0 0
    %188 = vmatprep.subr.bf16.mxu0 0
    %189 = vmatpush1.bf16.msra.mxu0 0
    %190 = vmatprep.mubr.bf16.mxu0 0
    %191 = vmatmul.mubr.bf16.gmra.mrb[0].mxu0 %v86
    %v192 = vpop.f32.mrb[0].mxu0
    %v193 = vadd.f32 %v108, %v192
    %v194 = vpop.f32.mrb[0].mxu0
    %v195 = vpop.f32.mrb[0].mxu0
    %v196 = vpop.f32.mrb[0].mxu0
    %197 = vdwg.mxu0
    %v198 = vmax.f32 %v193, 0.0
    %v199 = vpack.c.bf16 %v198, %v198
    %v200 = vld [vmem:[#allocation8] sm:$0xf]
    %v201 = vld [vmem:[#allocation8 + $0x4] sm:$0xf]
    %v202 = vld [vmem:[#allocation8 + $0x8] sm:$0xf]
    %v203 = vld [vmem:[#allocation8 + $0xc] sm:$0xf]
    %v204 = vld [vmem:[#allocation8 + $0x10] sm:$0xf]
    %v205 = vld [vmem:[#allocation8 + $0x14] sm:$0xf]
    %v206 = vld [vmem:[#allocation8 + $0x18] sm:$0xf]
    %v207 = vld [vmem:[#allocation8 + $0x1c] sm:$0xf]
    %v208 = vld [vmem:[#allocation8 + $0x20] sm:$0xf]
    %v209 = vld [vmem:[#allocation8 + $0x24] sm:$0xf]
    %v210 = vld [vmem:[#allocation8 + $0x28] sm:$0xf]
    %v211 = vld [vmem:[#allocation8 + $0x2c] sm:$0xf]
    %v212 = vld [vmem:[#allocation8 + $0x30] sm:$0xf]
    %v213 = vld [vmem:[#allocation8 + $0x34] sm:$0xf]
    %v214 = vld [vmem:[#allocation8 + $0x38] sm:$0xf]
    %v215 = vld [vmem:[#allocation8 + $0x3c] sm:$0xf]
    %v216 = vld [vmem:[%s4] sm:$0x1]
    %v218 = vlaneseq
    %v219 = vshrl.u32 %v218, 7
    %v220 = vsub.s32 0, %v219
    %v221 = vrot.slane %v216, %v220
    %v239 = vunpack.c.l.b16 %v200
    %v240 = vunpack.c.l.b16 %v201
    %v241 = vunpack.c.l.b16 %v202
    %v242 = vunpack.c.l.b16 %v203
    %v243 = vunpack.c.l.b16 %v204
    %v244 = vunpack.c.l.b16 %v205
    %v245 = vunpack.c.l.b16 %v206
    %v246 = vunpack.c.l.b16 %v207
    %v247 = vunpack.c.l.b16 %v208
    %v248 = vunpack.c.l.b16 %v209
    %v249 = vunpack.c.l.b16 %v210
    %v250 = vunpack.c.l.b16 %v211
    %v251 = vunpack.c.l.b16 %v212
    %v252 = vunpack.c.l.b16 %v213
    %v253 = vunpack.c.l.b16 %v214
    %v254 = vunpack.c.l.b16 %v215
    %v255 = vpack.c.b16 %v240, %v239
    %v256 = vpack.c.b16 %v242, %v241
    %v257 = vpack.c.b16 %v244, %v243
    %v258 = vpack.c.b16 %v246, %v245
    %v259 = vpack.c.b16 %v248, %v247
    %v260 = vpack.c.b16 %v250, %v249
    %v261 = vpack.c.b16 %v252, %v251
    %v262 = vpack.c.b16 %v254, %v253
    %271 = vmatprep.subr.bf16.mxu0 0
    %272 = vmatpush1.bf16.msra.mxu0 %v255
    %273 = vmatprep.subr.bf16.mxu0 0
    %274 = vmatpush1.bf16.msra.mxu0 %v256
    %275 = vmatprep.subr.bf16.mxu0 0
    %276 = vmatpush1.bf16.msra.mxu0 %v257
    %277 = vmatprep.subr.bf16.mxu0 0
    %278 = vmatpush1.bf16.msra.mxu0 %v258
    %279 = vmatprep.subr.bf16.mxu0 0
    %280 = vmatpush1.bf16.msra.mxu0 %v259
    %281 = vmatprep.subr.bf16.mxu0 0
    %282 = vmatpush1.bf16.msra.mxu0 %v260
    %283 = vmatprep.subr.bf16.mxu0 0
    %284 = vmatpush1.bf16.msra.mxu0 %v261
    %285 = vmatprep.subr.bf16.mxu0 0
    %286 = vmatpush1.bf16.msra.mxu0 %v262
    %287 = vmatprep.subr.bf16.mxu0 0
    %288 = vmatpush1.bf16.msra.mxu0 0
    %289 = vmatprep.subr.bf16.mxu0 0
    %290 = vmatpush1.bf16.msra.mxu0 0
    %291 = vmatprep.subr.bf16.mxu0 0
    %292 = vmatpush1.bf16.msra.mxu0 0
    %293 = vmatprep.subr.bf16.mxu0 0
    %294 = vmatpush1.bf16.msra.mxu0 0
    %295 = vmatprep.subr.bf16.mxu0 0
    %296 = vmatpush1.bf16.msra.mxu0 0
    %297 = vmatprep.subr.bf16.mxu0 0
    %298 = vmatpush1.bf16.msra.mxu0 0
    %299 = vmatprep.subr.bf16.mxu0 0
    %300 = vmatpush1.bf16.msra.mxu0 0
    %301 = vmatprep.subr.bf16.mxu0 0
    %302 = vmatpush1.bf16.msra.mxu0 0
    %303 = vmatprep.mubr.bf16.mxu0 0
    %304 = vmatmul.mubr.bf16.gmra.mrb[0].mxu0 %v199
    %v305 = vpop.f32.mrb[0].mxu0
    %v306 = vadd.f32 %v221, %v305
    %v307 = vpop.f32.mrb[0].mxu0
    %v308 = vpop.f32.mrb[0].mxu0
    %v309 = vpop.f32.mrb[0].mxu0
    %310 = vdwg.mxu0
    %v311 = vmax.f32 %v306, 0.0
    %v312 = vpack.c.bf16 %v311, %v311
    %v313 = vld [vmem:[#allocation9] sm:$0xf]
    %v314 = vld [vmem:[#allocation9 + $0x4] sm:$0xf]
    %v315 = vld [vmem:[#allocation9 + $0x8] sm:$0xf]
    %v316 = vld [vmem:[#allocation9 + $0xc] sm:$0xf]
    %v317 = vld [vmem:[#allocation9 + $0x10] sm:$0xf]
    %v318 = vld [vmem:[#allocation9 + $0x14] sm:$0xf]
    %v319 = vld [vmem:[#allocation9 + $0x18] sm:$0xf]
    %v320 = vld [vmem:[#allocation9 + $0x1c] sm:$0xf]
    %v321 = vld [vmem:[#allocation9 + $0x20] sm:$0xf]
    %v322 = vld [vmem:[#allocation9 + $0x24] sm:$0xf]
    %v323 = vld [vmem:[#allocation9 + $0x28] sm:$0xf]
    %v324 = vld [vmem:[#allocation9 + $0x2c] sm:$0xf]
    %v325 = vld [vmem:[#allocation9 + $0x30] sm:$0xf]
    %v326 = vld [vmem:[#allocation9 + $0x34] sm:$0xf]
    %v327 = vld [vmem:[#allocation9 + $0x38] sm:$0xf]
    %v328 = vld [vmem:[#allocation9 + $0x3c] sm:$0xf]
    %v329 = vld [vmem:[%s6] sm:$0x1]
    %v331 = vlaneseq
    %v332 = vshrl.u32 %v331, 7
    %v333 = vsub.s32 0, %v332
    %v334 = vrot.slane %v329, %v333
    %v352 = vunpack.c.l.b16 %v313
    %v353 = vunpack.c.l.b16 %v314
    %v354 = vunpack.c.l.b16 %v315
    %v355 = vunpack.c.l.b16 %v316
    %v356 = vunpack.c.l.b16 %v317
    %v357 = vunpack.c.l.b16 %v318
    %v358 = vunpack.c.l.b16 %v319
    %v359 = vunpack.c.l.b16 %v320
    %v360 = vunpack.c.l.b16 %v321
    %v361 = vunpack.c.l.b16 %v322
    %v362 = vunpack.c.l.b16 %v323
    %v363 = vunpack.c.l.b16 %v324
    %v364 = vunpack.c.l.b16 %v325
    %v365 = vunpack.c.l.b16 %v326
    %v366 = vunpack.c.l.b16 %v327
    %v367 = vunpack.c.l.b16 %v328
    %v368 = vpack.c.b16 %v353, %v352
    %v369 = vpack.c.b16 %v355, %v354
    %v370 = vpack.c.b16 %v357, %v356
    %v371 = vpack.c.b16 %v359, %v358
    %v372 = vpack.c.b16 %v361, %v360
    %v373 = vpack.c.b16 %v363, %v362
    %v374 = vpack.c.b16 %v365, %v364
    %v375 = vpack.c.b16 %v367, %v366
    %384 = vmatprep.subr.bf16.mxu0 0
    %385 = vmatpush1.bf16.msra.mxu0 %v368
    %386 = vmatprep.subr.bf16.mxu0 0
    %387 = vmatpush1.bf16.msra.mxu0 %v369
    %388 = vmatprep.subr.bf16.mxu0 0
    %389 = vmatpush1.bf16.msra.mxu0 %v370
    %390 = vmatprep.subr.bf16.mxu0 0
    %391 = vmatpush1.bf16.msra.mxu0 %v371
    %392 = vmatprep.subr.bf16.mxu0 0
    %393 = vmatpush1.bf16.msra.mxu0 %v372
    %394 = vmatprep.subr.bf16.mxu0 0
    %395 = vmatpush1.bf16.msra.mxu0 %v373
    %396 = vmatprep.subr.bf16.mxu0 0
    %397 = vmatpush1.bf16.msra.mxu0 %v374
    %398 = vmatprep.subr.bf16.mxu0 0
    %399 = vmatpush1.bf16.msra.mxu0 %v375
    %400 = vmatprep.subr.bf16.mxu0 0
    %401 = vmatpush1.bf16.msra.mxu0 0
    %402 = vmatprep.subr.bf16.mxu0 0
    %403 = vmatpush1.bf16.msra.mxu0 0
    %404 = vmatprep.subr.bf16.mxu0 0
    %405 = vmatpush1.bf16.msra.mxu0 0
    %406 = vmatprep.subr.bf16.mxu0 0
    %407 = vmatpush1.bf16.msra.mxu0 0
    %408 = vmatprep.subr.bf16.mxu0 0
    %409 = vmatpush1.bf16.msra.mxu0 0
    %410 = vmatprep.subr.bf16.mxu0 0
    %411 = vmatpush1.bf16.msra.mxu0 0
    %412 = vmatprep.subr.bf16.mxu0 0
    %413 = vmatpush1.bf16.msra.mxu0 0
    %414 = vmatprep.subr.bf16.mxu0 0
    %415 = vmatpush1.bf16.msra.mxu0 0
    %416 = vmatprep.mubr.bf16.mxu0 0
    %417 = vmatmul.mubr.bf16.gmra.mrb[0].mxu0 %v312
    %v418 = vpop.f32.mrb[0].mxu0
    %v419 = vadd.f32 %v334, %v418
    %v420 = vpop.f32.mrb[0].mxu0
    %v421 = vpop.f32.mrb[0].mxu0
    %v422 = vpop.f32.mrb[0].mxu0
    %423 = vdwg.mxu0
    %vm424 = vcmask 80896
    %425 = vst.msk [vmem:[#allocation11] sm:$0xff] %vm424, %v419
    // Predicated region
    $region46: #{tpu_custom_call.1} parent=1 // pred_check
      _
    $region47: #{tpu_custom_call.1} parent=1 // pred_check_branch
      %427 = sbr.rel (0) target = $region49
    $region48: #{tpu_custom_call.1} parent=1 // pred_region
      %s429 = ssub.s32 128, 128
      %430 = vsyncadd [#allocation5], %s429
      %s432 = sshll.u32 [#allocation11], 4
      %s433 = int_to_ptr.vmem [resolvable:$true] %s432
      %435 = dma.vmem_to_hbm [thread:$0]  %s433, 128, %s7, [#allocation5]
    $region49: #{tpu_custom_call.1} parent=1 // pred_fallthru
      _
    // Predicated region
    $region50: #{tpu_custom_call.1} parent=1 // pred_check
      _
    $region51: #{tpu_custom_call.1} parent=1 // pred_check_branch
      %437 = sbr.rel (0) target = $region53
    $region52: #{tpu_custom_call.1} parent=1 // pred_region
      %438 = dma.done [#allocation5], 128
    $region53: #{tpu_custom_call.1} parent=1 // pred_fallthru
      _
    %439 = vsyncpa [#allocation4], 1
    %440 = vsyncpa [#allocation7], 1
    %441 = vsyncpa [#allocation10], 1
    %442 = vsyncpa [#allocation5], 1

</llo_original>
